<compile_context>
chip_gen: v7x
topology: tpu7x:2x2x1
jax: 0.10.0
libtpu: 0.0.40
codegen_flags: <defaults>
</compile_context>

<pallas_src>
import functools

import jax
import jax.numpy as jnp
from jax.experimental import pallas as pl
from jax.experimental.pallas import tpu as pltpu


def _concat_pool_kernel(x_ref, o_ref, sum_ref, max_ref, *, hw, tk, inv_hw):
    # x_ref  : (tc, tk)  input block -- channels on sublanes, spatial on lanes.
    # o_ref  : (2, tc)   output block -- row 0 = avg, row 1 = max.
    # sum_ref: (1, tc) f32 running sum; max_ref: (1, tc) f32 running max.
    k = pl.program_id(2)
    nk = pl.num_programs(2)

    @pl.when(k == 0)
    def _init():
        sum_ref[...] = jnp.zeros(sum_ref.shape, dtype=sum_ref.dtype)
        max_ref[...] = jnp.full(max_ref.shape, -jnp.inf, dtype=max_ref.dtype)

    x = x_ref[...].astype(jnp.float32)          # (tc, tk); no-op for f32 inputs

    rem = hw % tk                               # static
    if rem != 0:
        # Only the last k-step has a padded lane tail; keep the mask off the
        # hot loop so full tiles stay DMA-bound.
        @pl.when(k < nk - 1)
        def _full_tile():
            sum_ref[...] += jnp.sum(x, axis=-1)[None, :]
            max_ref[...] = jnp.maximum(max_ref[...], jnp.max(x, axis=-1)[None, :])

        @pl.when(k == nk - 1)
        def _tail_tile():
            lane = jax.lax.broadcasted_iota(jnp.int32, x.shape, 1)
            valid = lane < rem
            xs = jnp.where(valid, x, 0.0)
            xm = jnp.where(valid, x, -jnp.inf)
            sum_ref[...] += jnp.sum(xs, axis=-1)[None, :]
            max_ref[...] = jnp.maximum(max_ref[...], jnp.max(xm, axis=-1)[None, :])
    else:
        sum_ref[...] += jnp.sum(x, axis=-1)[None, :]
        max_ref[...] = jnp.maximum(max_ref[...], jnp.max(x, axis=-1)[None, :])

    @pl.when(k == nk - 1)
    def _finalize():
        avg = sum_ref[...] * inv_hw                              # (1, tc) f32, true 1/HW
        # Single fused (2, tc) store: row 0 = avg, row 1 = max.
        o_ref[...] = jnp.concatenate([avg, max_ref[...]], axis=0).astype(o_ref.dtype)


def _round_up(x, m):
    return ((x + m - 1) // m) * m


def _choose_tiles(N, C, hw, itemsize, block_bytes):
    """Pick (tc, tk) for per-batch-element (C, hw) blocks.

    Constraints (input block last-two dims & output block last dim):
      * tk == hw  or tk % 128 == 0
      * tc == C   or tc % 128 == 0   (128 also covers the 8/16/32 dtype
                                      sublane multiples of f32/bf16/int8)
    Targets ~block_bytes per input block so the double-buffered footprint stays
    well inside v7x's 64 MiB VMEM while amortizing the ~0.35us/step overhead.
    """
    row_bytes = hw * itemsize
    if C * row_bytes <= block_bytes:
        tc, tk = C, hw
        # Small batch: split C so a v7x megacore gets >= 2 parallel blocks.
        if N == 1 and C >= 256:
            tc = min(C, _round_up(pl.cdiv(C, 2), 128))
        return tc, tk
    if 128 * row_bytes <= block_bytes:
        tc = (block_bytes // row_bytes) // 128 * 128     # >= 128 and < C here
        return tc, hw
    tc = C if C <= 128 else 128
    tk = max(128, (block_bytes // (tc * itemsize)) // 128 * 128)
    if tk >= hw:
        tk = hw
    return tc, tk


def adaptive_concat_pool2d(x, *, block_bytes=4 * 1024 * 1024):
    """AdaptiveConcatPool2d with sz=(1,1): (N,C,H,W) -> (N,2C,1,1)."""
    if not jnp.issubdtype(x.dtype, jnp.floating):
        raise TypeError("adaptive_concat_pool2d expects a floating dtype input")
    N, C, H, W = x.shape
    hw = H * W
    # Contiguous reshape only -- no extra HBM pass (unlike an NHWC transpose).
    x3 = x.reshape(N, C, hw)

    itemsize = jnp.dtype(x.dtype).itemsize
    tc, tk = _choose_tiles(N, C, hw, itemsize, block_bytes)
    grid = (N, pl.cdiv(C, tc), pl.cdiv(hw, tk))

    kernel = functools.partial(_concat_pool_kernel, hw=hw, tk=tk, inv_hw=1.0 / hw)

    out = pl.pallas_call(
        kernel,
        out_shape=jax.ShapeDtypeStruct((N, 2, C), x.dtype),
        grid_spec=pltpu.PrefetchScalarGridSpec(
            num_scalar_prefetch=0,
            grid=grid,
            in_specs=[pl.BlockSpec((pl.Squeezed(), tc, tk),
                                   lambda n, c, k: (n, c, k))],
            out_specs=pl.BlockSpec((pl.Squeezed(), 2, tc),
                                   lambda n, c, k: (n, 0, c)),
            scratch_shapes=[
                pltpu.VMEM((1, tc), jnp.float32),   # running sum
                pltpu.VMEM((1, tc), jnp.float32),   # running max
            ],
        ),
        compiler_params=pltpu.CompilerParams(
            dimension_semantics=("parallel", "parallel", "arbitrary"),
            vmem_limit_bytes=32 * 1024 * 1024),
    )(x3)

    # (N, 2, C) is contiguous as (N, 2C): channels [0,C) = avg, [C,2C) = max,
    # matching torch.cat([avg_pool, max_pool], dim=1). Reshape is free.
    return out.reshape(N, 2 * C, 1, 1)


def _reference(x):
    avg = jnp.mean(x, axis=(2, 3), keepdims=True)   # (N, C, 1, 1)
    mx = jnp.max(x, axis=(2, 3), keepdims=True)     # (N, C, 1, 1)
    return jnp.concatenate([avg, mx], axis=1)       # (N, 2C, 1, 1)


if __name__ == "__main__":
    k1, k2, k3 = jax.random.split(jax.random.PRNGKey(0), 3)

    # 1) Module-default small shape, f32, single-step reduction.
    N, C, H, W = 2, 4, 16, 16
    x = jax.random.normal(k1, (N, C, H, W), dtype=jnp.float32)
    y = adaptive_concat_pool2d(x)
    jax.block_until_ready(y)
    y_ref = _reference(x)
    assert y.shape == (N, 2 * C, 1, 1), y.shape
    assert jnp.allclose(y, y_ref, atol=1e-5, rtol=1e-5), "f32 mismatch vs reference"

    # 2) bf16 path + N==1 channel split (feeds both v7x TensorCores).
    x2 = jax.random.normal(k2, (1, 256, 7, 7), dtype=jnp.bfloat16)
    y2 = adaptive_concat_pool2d(x2)
    jax.block_until_ready(y2)
    y2_ref = _reference(x2.astype(jnp.float32))
    assert y2.shape == (1, 512, 1, 1), y2.shape
    assert jnp.allclose(y2.astype(jnp.float32), y2_ref, atol=1e-2, rtol=1e-2), \
        "bf16 mismatch vs reference"

    # 3) Multi-step hw reduction with a masked tail (forced via tiny block_bytes).
    x3 = jax.random.normal(k3, (2, 8, 15, 20), dtype=jnp.float32)
    y3 = adaptive_concat_pool2d(x3, block_bytes=8 * 1024)
    jax.block_until_ready(y3)
    y3_ref = _reference(x3)
    assert y3.shape == (2, 16, 1, 1), y3.shape
    assert jnp.allclose(y3, y3_ref, atol=1e-4, rtol=1e-4), "tiled mismatch vs reference"

    print("KERNEL_OK")
</pallas_src>

<mosaic_0001>
module attributes {stable_mosaic.version = 11 : i64} {
  func.func @_concat_pool_kernel(%arg0: i32, %arg1: i32, %arg2: i32, %arg3: memref<1x4x256xf32, #tpu.memory_space<vmem>>, %arg4: memref<1x2x4xf32, #tpu.memory_space<vmem>>, %arg5: memref<1x4xf32, #tpu.memory_space<vmem>>, %arg6: memref<1x4xf32, #tpu.memory_space<vmem>>) attributes {dimension_semantics = [#tpu.dimension_semantics<parallel>, #tpu.dimension_semantics<parallel>, #tpu.dimension_semantics<arbitrary>], iteration_bounds = array<i64: 2, 1, 1>, scalar_prefetch = 0 : i64, scratch_operands = 2 : i64, tpu.core_type = #tpu.core_type<tc>, window_params = [{transform_indices = @transform_0, window_bounds = array<i64: 1, 4, 256>}, {transform_indices = @transform_1, window_bounds = array<i64: 1, 2, 4>}]} {
    %c0_i32 = arith.constant 0 : i32
    %0 = arith.cmpi eq, %arg2, %c0_i32 : i32
    %1 = arith.extui %0 : i1 to i32
    %c0_i32_0 = arith.constant 0 : i32
    %2 = arith.cmpi ne, %1, %c0_i32_0 : i32
    scf.if %2 {
      %cst_14 = arith.constant 0.000000e+00 : f32
      %18 = vector.broadcast %cst_14 : f32 to vector<1x4xf32>
      %c0_15 = arith.constant 0 : index
      %c0_16 = arith.constant 0 : index
      %19 = vector.load %arg5[%c0_15, %c0_16] : memref<1x4xf32, #tpu.memory_space<vmem>>, vector<1x4xf32>
      tpu.vector_store %arg5[%c0_15, %c0_16], %18 {strides = array<i32>} : memref<1x4xf32, #tpu.memory_space<vmem>>, vector<1x4xf32>,
      %cst_17 = arith.constant 0xFF800000 : f32
      %20 = vector.broadcast %cst_17 : f32 to vector<1x4xf32>
      %c0_18 = arith.constant 0 : index
      %c0_19 = arith.constant 0 : index
      %21 = vector.load %arg6[%c0_18, %c0_19] : memref<1x4xf32, #tpu.memory_space<vmem>>, vector<1x4xf32>
      tpu.vector_store %arg6[%c0_18, %c0_19], %20 {strides = array<i32>} : memref<1x4xf32, #tpu.memory_space<vmem>>, vector<1x4xf32>,
    } else {
    }
    %c0 = arith.constant 0 : index
    %c0_1 = arith.constant 0 : index
    %c0_2 = arith.constant 0 : index
    %3 = vector.load %arg3[%c0, %c0_1, %c0_2] : memref<1x4x256xf32, #tpu.memory_space<vmem>>, vector<1x4x256xf32>
    %4 = vector.shape_cast %3 : vector<1x4x256xf32> to vector<4x256xf32>
    %c0_3 = arith.constant 0 : index
    %c0_4 = arith.constant 0 : index
    %5 = vector.load %arg5[%c0_3, %c0_4] : memref<1x4xf32, #tpu.memory_space<vmem>>, vector<1x4xf32>
    %cst = arith.constant dense<0.000000e+00> : vector<4xf32>
    %6 = vector.multi_reduction <add>, %4, %cst [1] : vector<4x256xf32> to vector<4xf32>
    %7 = vector.shape_cast %6 : vector<4xf32> to vector<1x4xf32>
    %8 = arith.addf %5, %7 : vector<1x4xf32>
    %c0_5 = arith.constant 0 : index
    %c0_6 = arith.constant 0 : index
    %9 = vector.load %arg5[%c0_5, %c0_6] : memref<1x4xf32, #tpu.memory_space<vmem>>, vector<1x4xf32>
    tpu.vector_store %arg5[%c0_5, %c0_6], %8 {strides = array<i32>} : memref<1x4xf32, #tpu.memory_space<vmem>>, vector<1x4xf32>,
    %c0_7 = arith.constant 0 : index
    %c0_8 = arith.constant 0 : index
    %10 = vector.load %arg6[%c0_7, %c0_8] : memref<1x4xf32, #tpu.memory_space<vmem>>, vector<1x4xf32>
    %cst_9 = arith.constant dense<0xFF800000> : vector<4xf32>
    %11 = vector.multi_reduction <maximumf>, %4, %cst_9 [1] : vector<4x256xf32> to vector<4xf32>
    %12 = vector.shape_cast %11 : vector<4xf32> to vector<1x4xf32>
    %13 = arith.maximumf %10, %12 : vector<1x4xf32>
    %c0_10 = arith.constant 0 : index
    %c0_11 = arith.constant 0 : index
    %14 = vector.load %arg6[%c0_10, %c0_11] : memref<1x4xf32, #tpu.memory_space<vmem>>, vector<1x4xf32>
    tpu.vector_store %arg6[%c0_10, %c0_11], %13 {strides = array<i32>} : memref<1x4xf32, #tpu.memory_space<vmem>>, vector<1x4xf32>,
    %c0_i32_12 = arith.constant 0 : i32
    %15 = arith.cmpi eq, %arg2, %c0_i32_12 : i32
    %16 = arith.extui %15 : i1 to i32
    %c0_i32_13 = arith.constant 0 : i32
    %17 = arith.cmpi ne, %16, %c0_i32_13 : i32
    scf.if %17 {
      %c0_14 = arith.constant 0 : index
      %c0_15 = arith.constant 0 : index
      %18 = vector.load %arg5[%c0_14, %c0_15] : memref<1x4xf32, #tpu.memory_space<vmem>>, vector<1x4xf32>
      %cst_16 = arith.constant 3.906250e-03 : f32
      %19 = vector.broadcast %cst_16 : f32 to vector<1x4xf32>
      %20 = arith.mulf %18, %19 : vector<1x4xf32>
      %c0_17 = arith.constant 0 : index
      %c0_18 = arith.constant 0 : index
      %21 = vector.load %arg6[%c0_17, %c0_18] : memref<1x4xf32, #tpu.memory_space<vmem>>, vector<1x4xf32>
      %22 = tpu.concatenate %20, %21 in 0 : vector<1x4xf32>, vector<1x4xf32> -> vector<2x4xf32>
      %c0_19 = arith.constant 0 : index
      %c0_20 = arith.constant 0 : index
      %c0_21 = arith.constant 0 : index
      %23 = vector.load %arg4[%c0_19, %c0_20, %c0_21] : memref<1x2x4xf32, #tpu.memory_space<vmem>>, vector<1x2x4xf32>
      %24 = vector.shape_cast %23 : vector<1x2x4xf32> to vector<2x4xf32>
      %25 = vector.shape_cast %22 : vector<2x4xf32> to vector<1x2x4xf32>
      tpu.vector_store %arg4[%c0_19, %c0_20, %c0_21], %25 {strides = array<i32>} : memref<1x2x4xf32, #tpu.memory_space<vmem>>, vector<1x2x4xf32>,
    } else {
    }
    return
  }
  func.func @transform_0(%arg0: i32, %arg1: i32, %arg2: i32) -> (i32, i32, i32) {
    %c0_i32 = arith.constant 0 : i32
    return %arg0, %arg1, %arg2 : i32, i32, i32
  }
  func.func @transform_1(%arg0: i32, %arg1: i32, %arg2: i32) -> (i32, i32, i32) {
    %c0_i32 = arith.constant 0 : i32
    %c0_i32_0 = arith.constant 0 : i32
    return %arg0, %c0_i32, %arg1 : i32, i32, i32
  }
}

</mosaic_0001>

<llo_original>
// kernel: tpu_custom_call.1
$region0: #{tpu_custom_call.1}
  #allocation0 [shape = 'u32[]', space=smem, size = 0x4, offset = 0x4, fixed_abs, tag = 'smem constant byte address 0x4 - core index']
  #allocation1 [shape = 'u32[144,128]{1,0:T(1,128)}', space=vmem, size = 0x12000, scoped, tag = 'internal scratch']
  #allocation2 [shape = 'f32[1,4]{1,0:T(1,128)}', space=vmem, size = 0x200, scoped, tag = 'scratch operand']
  #allocation3 [shape = 'f32[1,4]{1,0:T(1,128)}', space=vmem, size = 0x200, scoped, tag = 'scratch operand']
  %s0 = inlined_call_operand.hbm [shape: f32[2,4,256], index: 0, kind: input, shape index: {}]
  %s1 = inlined_call_operand.hbm [shape: f32[2,2,4], index: 1, kind: output, shape index: {}]
  %s2 = sld [smem:[#allocation0]]
  $region49: #{tpu_custom_call.1} parent=0
    _
  %s4 = ssub.s32 1, %s2
  %s5 = scalar_select 0, %s4, %s2
  $region1: #{tpu_custom_call.1} parent=0
    #allocation4 [shape = 'u8[8192]{0}', space=vmem, size = 0x2000, scoped, tag = 'input window, operand 0']
    #allocation5 [shape = 's32[2]{0}', space=sflag, size = 0x8, scoped, tag = 'scoped memory for tpu_custom_call.1']
    #allocation6 [shape = 's32[2]{0}', space=sflag, size = 0x8, scoped, tag = 'scoped memory for tpu_custom_call.1']
    #allocation7 [shape = 'u8[2048]{0}', space=vmem, size = 0x800, scoped, tag = 'output window, operand 0']
    %6 = vsyncpa [#allocation5], 0
    %s7 = scalar_lea.sflag [#allocation5], 1
    %8 = vsyncpa %s7, 0
    %9 = vsyncpa [#allocation6], 0
    %s10 = scalar_lea.sflag [#allocation6], 1
    %11 = vsyncpa %s10, 0
    loop: start=0, step=1, limit=4
    $region2: #{tpu_custom_call.1} parent=1 // loop_pre_header
      _
    $region3: #{tpu_custom_call.1} parent=1 // loop_header
      %s13 = sphi 0, %s17
      %p14 = scmp.ge.s32.totalorder %s13, 4
      %s20 = sphi 0, %s39
      %s21 = sphi 0, %s35
      %s22 = sphi 0, %s31
      %s23 = sphi 0, %s20
      %s24 = sphi 0, %s21
      %s25 = sphi 0, %s22
      %s26 = sphi 0, %s23
      %s27 = sphi 0, %s24
      %s28 = sphi 0, %s25
      %s46 = sphi 0, %s48
      %s49 = sphi 0, %s46
      %s50 = sphi 0, %s49
      %s66 = sphi 0, %s50
      %s74 = sphi 0, %s76
      %s77 = sphi 0, %s74
      %s78 = sphi 0, %s77
      %s94 = sphi 0, %s78
    $region4: #{tpu_custom_call.1} parent=1 // loop_header_branch
      %16 = sbr.rel (%p14) target = $region8
    $region5: #{tpu_custom_call.1} parent=1 // loop_body
      %s18 = ssub.s32 %s13, 1
      %s19 = ssub.s32 %s13, 2
      %s29 = sadd.s32 1, %s22
      %p30 = scmp.ge.s32.totalorder %s29, 1
      %s31 = scalar_select %p30, 0, %s29
      %s32 = sadd.s32 1, %s21
      %s33 = scalar_select %p30, %s32, %s21
      %p34 = scmp.ge.s32.totalorder %s33, 1
      %s35 = scalar_select %p34, 0, %s33
      %s36 = sadd.s32 1, %s20
      %s37 = scalar_select %p34, %s36, %s20
      %p38 = scmp.ge.s32.totalorder %s37, 2
      %s39 = scalar_select %p38, 0, %s37
      %s40 = ssub.s32 %s20, %s39
      %s41 = ssub.s32 %s21, %s35
      %s42 = sor.u32 %s40, %s41
      %s43 = ssub.s32 %s22, %s31
      %s44 = sor.u32 %s42, %s43
      %p45 = scmp.eq.s32.totalorder %s44, 0
      %s47 = sadd.s32 %s46, 1
      %s48 = scalar_select %p45, %s46, %s47
      %p51 = pneg %p45
      %p52 = scmp.eq.s32.totalorder %s13, 1
      %p53 = por %p51, %p52
      %p54 = scmp.ne.s32.totalorder %s46, %s49
      %p55 = scmp.eq.s32.totalorder %s13, 0
      %p56 = por %p54, %p55
      %p57 = scmp.ne.s32.totalorder %s46, %s49
      %p58 = scmp.eq.s32.totalorder %s18, 1
      %p59 = por %p57, %p58
      %p60 = scmp.ne.s32.totalorder %s49, %s50
      %p61 = scmp.eq.s32.totalorder %s18, 0
      %p62 = por %p60, %p61
      %p63 = scmp.ne.s32.totalorder %s49, %s50
      %p64 = scmp.eq.s32.totalorder %s19, 1
      %p65 = por %p63, %p64
      %p67 = scmp.ne.s32.totalorder %s50, %s66
      %p68 = scmp.eq.s32.totalorder %s19, 0
      %p69 = por %p67, %p68
      %s70 = ssub.s32 %s20, %s39
      %s71 = ssub.s32 %s21, %s35
      %s72 = sor.u32 %s70, %s71
      %p73 = scmp.eq.s32.totalorder %s72, 0
      %s75 = sadd.s32 %s74, 1
      %s76 = scalar_select %p73, %s74, %s75
      %p79 = pneg %p73
      %p80 = scmp.eq.s32.totalorder %s13, 1
      %p81 = por %p79, %p80
      %p82 = scmp.ne.s32.totalorder %s74, %s77
      %p83 = scmp.eq.s32.totalorder %s13, 0
      %p84 = por %p82, %p83
      %p85 = scmp.ne.s32.totalorder %s74, %s77
      %p86 = scmp.eq.s32.totalorder %s18, 1
      %p87 = por %p85, %p86
      %p88 = scmp.ne.s32.totalorder %s77, %s78
      %p89 = scmp.eq.s32.totalorder %s18, 0
      %p90 = por %p88, %p89
      %p91 = scmp.ne.s32.totalorder %s77, %s78
      %p92 = scmp.eq.s32.totalorder %s19, 1
      %p93 = por %p91, %p92
      %p95 = scmp.ne.s32.totalorder %s78, %s94
      %p96 = scmp.eq.s32.totalorder %s19, 0
      %p97 = por %p95, %p96
      %p98 = scmp.le.s32.totalorder 1, %s13
      %p99 = scmp.lt.s32.totalorder %s13, 3
      %p100 = pnand %p98, %p99
      %p101 = pneg %p100
      // Predicated region
      $region9: #{tpu_custom_call.1} parent=5 // pred_check
        _
      $region10: #{tpu_custom_call.1} parent=5 // pred_check_branch
        %103 = sbr.rel (%p100) target = $region12
      $region11: #{tpu_custom_call.1} parent=5 // pred_region
        %s104 = ssub.s32 %s13, 1
      $region12: #{tpu_custom_call.1} parent=5 // pred_fallthru
        _
      %p105 = scmp.lt.s32.totalorder %s13, 2
      // Predicated region
      $region13: #{tpu_custom_call.1} parent=5 // pred_check
        %p106 = pneg %p105
      $region14: #{tpu_custom_call.1} parent=5 // pred_check_branch
        %108 = sbr.rel (%p106) target = $region16
      $region15: #{tpu_custom_call.1} parent=5 // pred_region
        // Predicated region
        $region17: #{tpu_custom_call.1} parent=15 // pred_check
          %p109 = pneg %p56
        $region18: #{tpu_custom_call.1} parent=15 // pred_check_branch
          %111 = sbr.rel (%p109) target = $region20
        $region19: #{tpu_custom_call.1} parent=15 // pred_region
          %s112 = sand.u32 %s46, 1
          %s113 = scalar_lea.sflag [#allocation5], %s112
          %s114 = sand.u32 %s46, 1
          %s115 = smul.addr %s114, 8
          %s116 = scalar_lea.vmem [#allocation4], %s115
          %s117 = smul.u32 2, %s22
          %s119 = ssub.s32 128, 128
          %120 = vsyncadd %s113, %s119
          %s121 = smul.addr %s21, 2
          %s122 = sadd.s32 %s117, %s121
          %s123 = smul.addr %s20, 2
          %s124 = sadd.s32 %s122, %s123
          %s125 = smul.addr %s124, 64
          %s126 = scalar_lea.hbm %s0, %s125
          %s128 = sshll.u32 %s116, 4
          %s129 = int_to_ptr.vmem [resolvable:$true] %s128
          %131 = dma.hbm_to_vmem [thread:$0]  %s126, 128, %s129, %s113
        $region20: #{tpu_custom_call.1} parent=15 // pred_fallthru
          _
      $region16: #{tpu_custom_call.1} parent=5 // pred_fallthru
        _
      %p132 = scmp.le.s32.totalorder 1, %s13
      %p133 = scmp.lt.s32.totalorder %s13, 3
      %p134 = pnand %p132, %p133
      %p135 = pneg %p134
      // Predicated region
      $region21: #{tpu_custom_call.1} parent=5 // pred_check
        _
      $region22: #{tpu_custom_call.1} parent=5 // pred_check_branch
        %137 = sbr.rel (%p134) target = $region24
      $region23: #{tpu_custom_call.1} parent=5 // pred_region
        %s138 = ssub.s32 %s13, 1
        %s139 = sand.u32 %s49, 1
        %s140 = scalar_lea.sflag [#allocation5], %s139
        %s141 = sand.u32 %s49, 1
        %s142 = smul.addr %s141, 8
        %s143 = scalar_lea.vmem [#allocation4], %s142
        // Predicated region
        $region25: #{tpu_custom_call.1} parent=23 // pred_check
          %p144 = pneg %p62
        $region26: #{tpu_custom_call.1} parent=23 // pred_check_branch
          %146 = sbr.rel (%p144) target = $region28
        $region27: #{tpu_custom_call.1} parent=23 // pred_region
          %147 = dma.done %s140, 128
        $region28: #{tpu_custom_call.1} parent=23 // pred_fallthru
          _
        %s148 = sand.u32 %s49, 1
        %s149 = scalar_lea.sflag [#allocation5], %s148
        %s150 = sand.u32 %s49, 1
        %s151 = smul.addr %s150, 8
        %s152 = scalar_lea.vmem [#allocation4], %s151
        %p153 = pneg %p62
        %p154 = pneg %p59
        %p155 = pneg %p90
        %p156 = pneg %p87
        %s157 = sand.u32 %s77, 1
        %s158 = scalar_lea.sflag [#allocation6], %s157
        %s159 = sand.u32 %s77, 1
        %s160 = smul.addr %s159, 2
        %s161 = scalar_lea.vmem [#allocation7], %s160
        %s162 = smul.u32 2, %s25
        %p163 = scmp.eq.s32.totalorder %s25, 0
        // Predicated region
        $region29: #{tpu_custom_call.1} parent=23 // pred_check
          %p164 = pneg %p163
        $region30: #{tpu_custom_call.1} parent=23 // pred_check_branch
          %166 = sbr.rel (%p164) target = $region32
        $region31: #{tpu_custom_call.1} parent=23 // pred_region
          %vm167 = vcmask 24576
          %168 = vst.msk [vmem:[#allocation2] sm:$0x1] %vm167, 0.0
          %169 = vst.msk [vmem:[#allocation3] sm:$0x1] %vm167, -inf
        $region32: #{tpu_custom_call.1} parent=23 // pred_fallthru
          _
        %v170 = vld [vmem:[%s143] sm:$0xff]
        %v171 = vld [vmem:[#allocation2] sm:$0x1]
        %v173 = vcombine.high %v170, %v170
        %vm175 = vcmask 1043456
        %v176 = vsel %vm175, %v170, 0.0
        %v177 = vsel %vm175, %v173, 0.0
        %v178 = vadd.f32 %v176, %v177
        %179 = vadd.xlane.f32.xlu0 %v178
        %v180 = vpop.xlane.xlu0 %179
        %v182 = vlaneseq
        %v183 = vshrl.u32 %v182, 7
        %v184 = vsub.s32 0, %v183
        %v185 = vrot.slane %v180, %v184
        %v186 = vlaneseq
        %v187 = vshrl.u32 %v186, 7
        %v188 = vsub.s32 1, %v187
        %v189 = vrot.slane %v180, %v188
        %v190 = vlaneseq
        %v191 = vshrl.u32 %v190, 7
        %v192 = vsub.s32 2, %v191
        %v193 = vrot.slane %v180, %v192
        %v194 = vlaneseq
        %v195 = vshrl.u32 %v194, 7
        %v196 = vsub.s32 3, %v195
        %v197 = vrot.slane %v180, %v196
        %v198 = vcombine.low %v185, %v189
        %v199 = vcombine.low %v193, %v197
        %v201 = vunpack.c.l.s4 1966171168
        %v202 = vunpack.c.0.s8 %v201
        %v203 = vlaneseq
        %v204 = vshrl.u32 %v203, 7
        %v205 = vsub.s32 %v202, %v204
        %v206 = vrot.slane %v198, %v205
        %v208 = vunpack.c.l.s4 1966171168
        %v209 = vunpack.c.0.s8 %v208
        %v210 = vlaneseq
        %v211 = vshrl.u32 %v210, 7
        %v212 = vsub.s32 %v209, %v211
        %v213 = vrot.slane %v199, %v212
        %v214 = vcombine.low %v206, %v213
        %v216 = vunpack.c.l.s4 1966171168
        %v217 = vunpack.c.0.s8 %v216
        %v218 = vlaneseq
        %v219 = vshrl.u32 %v218, 7
        %v220 = vsub.s32 %v217, %v219
        %v221 = vrot.slane %v214, %v220
        %222 = vset.pattern.permute.xlu0 0
        %223 = vperm.xlu0 %222, %v221
        %v224 = vpop.permute.xlu0 %223
        %v225 = vlaneseq
        %v226 = vand.u32 %v225, 127
        %v227 = vlaneseq
        %v228 = vshrl.u32 %v227, 7
        %v229 = vsub.s32 %v226, %v228
        %v230 = vrot.slane %v224, %v229
        %v232 = vunpack.c.l.s4 1966171168
        %v233 = vunpack.c.0.s8 %v232
        %v234 = vlaneseq
        %v235 = vshrl.u32 %v234, 7
        %v236 = vsub.s32 %v233, %v235
        %v237 = vrot.slane %v230, %v236
        %v239 = vunpack.c.l.s4 1966171168
        %v240 = vunpack.c.0.s8 %v239
        %v241 = vlaneseq
        %v242 = vshrl.u32 %v241, 7
        %v243 = vsub.s32 %v240, %v242
        %v244 = vrot.slane %v237, %v243
        %v246 = vadd.f32 %v171, %v244
        %vm247 = vcmask 24576
        %248 = vst.msk [vmem:[#allocation2] sm:$0x1] %vm247, %v246
        %v249 = vld [vmem:[#allocation3] sm:$0x1]
        %v250 = vsel %vm175, %v170, -inf
        %v251 = vsel %vm175, %v173, -inf
        %v252 = vmax.f32 %v250, %v251
        %253 = vmax.xlane.f32.xlu0 %v252
        %v254 = vpop.xlane.xlu0 %253
        %v256 = vlaneseq
        %v257 = vshrl.u32 %v256, 7
        %v258 = vsub.s32 0, %v257
        %v259 = vrot.slane %v254, %v258
        %v260 = vlaneseq
        %v261 = vshrl.u32 %v260, 7
        %v262 = vsub.s32 1, %v261
        %v263 = vrot.slane %v254, %v262
        %v264 = vlaneseq
        %v265 = vshrl.u32 %v264, 7
        %v266 = vsub.s32 2, %v265
        %v267 = vrot.slane %v254, %v266
        %v268 = vlaneseq
        %v269 = vshrl.u32 %v268, 7
        %v270 = vsub.s32 3, %v269
        %v271 = vrot.slane %v254, %v270
        %v272 = vcombine.low %v259, %v263
        %v273 = vcombine.low %v267, %v271
        %v275 = vunpack.c.l.s4 1966171168
        %v276 = vunpack.c.0.s8 %v275
        %v277 = vlaneseq
        %v278 = vshrl.u32 %v277, 7
        %v279 = vsub.s32 %v276, %v278
        %v280 = vrot.slane %v272, %v279
        %v282 = vunpack.c.l.s4 1966171168
        %v283 = vunpack.c.0.s8 %v282
        %v284 = vlaneseq
        %v285 = vshrl.u32 %v284, 7
        %v286 = vsub.s32 %v283, %v285
        %v287 = vrot.slane %v273, %v286
        %v288 = vcombine.low %v280, %v287
        %v290 = vunpack.c.l.s4 1966171168
        %v291 = vunpack.c.0.s8 %v290
        %v292 = vlaneseq
        %v293 = vshrl.u32 %v292, 7
        %v294 = vsub.s32 %v291, %v293
        %v295 = vrot.slane %v288, %v294
        %296 = vset.pattern.permute.xlu0 0
        %297 = vperm.xlu0 %296, %v295
        %v298 = vpop.permute.xlu0 %297
        %v299 = vlaneseq
        %v300 = vshrl.u32 %v299, 7
        %v301 = vsub.s32 %v226, %v300
        %v302 = vrot.slane %v298, %v301
        %v304 = vunpack.c.l.s4 1966171168
        %v305 = vunpack.c.0.s8 %v304
        %v306 = vlaneseq
        %v307 = vshrl.u32 %v306, 7
        %v308 = vsub.s32 %v305, %v307
        %v309 = vrot.slane %v302, %v308
        %v311 = vunpack.c.l.s4 1966171168
        %v312 = vunpack.c.0.s8 %v311
        %v313 = vlaneseq
        %v314 = vshrl.u32 %v313, 7
        %v315 = vsub.s32 %v312, %v314
        %v316 = vrot.slane %v309, %v315
        %v318 = vmax.f32 %v249, %v316
        %319 = vst.msk [vmem:[#allocation3] sm:$0x1] %vm247, %v318
        // Predicated region
        $region33: #{tpu_custom_call.1} parent=23 // pred_check
          %p320 = pneg %p163
        $region34: #{tpu_custom_call.1} parent=23 // pred_check_branch
          %322 = sbr.rel (%p320) target = $region36
        $region35: #{tpu_custom_call.1} parent=23 // pred_region
          %v323 = vld [vmem:[#allocation2] sm:$0x1]
          %v324 = vmul.f32 %v323, 0.00390625
          %v325 = vld [vmem:[#allocation3] sm:$0x1]
          %v327 = vlaneseq
          %v328 = vshrl.u32 %v327, 7
          %v329 = vsub.s32 0, %v328
          %v330 = vrot.slane %v325, %v329
          %vm332 = vcmask 1040384
          %v333 = vsel %vm332, %v324, %v330
          %vm334 = vcmask 25600
          %335 = vst.msk [vmem:[%s161] sm:$0x3] %vm334, %v333
        $region36: #{tpu_custom_call.1} parent=23 // pred_fallthru
          _
        %s336 = sand.u32 %s77, 1
        %s337 = scalar_lea.sflag [#allocation6], %s336
        %s338 = sand.u32 %s77, 1
        %s339 = smul.addr %s338, 2
        %s340 = scalar_lea.vmem [#allocation7], %s339
        // Predicated region
        $region37: #{tpu_custom_call.1} parent=23 // pred_check
          %p341 = pneg %p87
        $region38: #{tpu_custom_call.1} parent=23 // pred_check_branch
          %343 = sbr.rel (%p341) target = $region40
        $region39: #{tpu_custom_call.1} parent=23 // pred_region
          %s345 = ssub.s32 32, 32
          %346 = vsyncadd %s337, %s345
          %s347 = sadd.s32 %s24, %s23
          %s348 = smul.addr %s347, 32
          %s349 = scalar_lea.hbm %s1, %s348
          %s351 = sshll.u32 %s340, 4
          %s352 = int_to_ptr.vmem [resolvable:$true] %s351
          %354 = dma.vmem_to_hbm [thread:$0]  %s352, 32, %s349, %s337
        $region40: #{tpu_custom_call.1} parent=23 // pred_fallthru
          _
      $region24: #{tpu_custom_call.1} parent=5 // pred_fallthru
        _
      %p355 = scmp.le.s32.totalorder 2, %s13
      // Predicated region
      $region41: #{tpu_custom_call.1} parent=5 // pred_check
        %p356 = pneg %p355
      $region42: #{tpu_custom_call.1} parent=5 // pred_check_branch
        %358 = sbr.rel (%p356) target = $region44
      $region43: #{tpu_custom_call.1} parent=5 // pred_region
        %s359 = ssub.s32 %s13, 2
        // Predicated region
        $region45: #{tpu_custom_call.1} parent=43 // pred_check
          %p360 = pneg %p93
        $region46: #{tpu_custom_call.1} parent=43 // pred_check_branch
          %362 = sbr.rel (%p360) target = $region48
        $region47: #{tpu_custom_call.1} parent=43 // pred_region
          %s363 = sand.u32 %s78, 1
          %s364 = scalar_lea.sflag [#allocation6], %s363
          %s365 = sand.u32 %s78, 1
          %s366 = smul.addr %s365, 2
          %s367 = scalar_lea.vmem [#allocation7], %s366
          %368 = dma.done %s364, 32
        $region48: #{tpu_custom_call.1} parent=43 // pred_fallthru
          _
      $region44: #{tpu_custom_call.1} parent=5 // pred_fallthru
        _
    $region6: #{tpu_custom_call.1} parent=1 // loop_footer
      %s17 = sadd.s32 1, %s13
    $region7: #{tpu_custom_call.1} parent=1 // loop_footer_branch
      %12 = sbr.rel target = $region3
    $region8: #{tpu_custom_call.1} parent=1 // loop_exit
      _
    %369 = vsyncpa [#allocation5], 1
    %s370 = scalar_lea.sflag [#allocation5], 1
    %371 = vsyncpa %s370, 1
    %372 = vsyncpa [#allocation6], 1
    %s373 = scalar_lea.sflag [#allocation6], 1
    %374 = vsyncpa %s373, 1

</llo_original>
